<compile_context>
chip_gen: v5e
topology: v5e:2x2
jax: 0.10.0
libtpu: 0.0.40
codegen_flags: <defaults>
</compile_context>

<pallas_src>
import jax
import jax.numpy as jnp
from jax import lax
from jax.experimental import pallas as pl
from jax.experimental.pallas import tpu as pltpu

_EPS = 1e-8  # torch.nn.CosineSimilarity default


def _cosine_distance_kernel(s_ref, q_ref, o_ref):
    s = s_ref[...].astype(jnp.float32)             # [tile_b, N, D]
    q = q_ref[...].astype(jnp.float32)             # [tile_b, N, D]

    dot = jnp.sum(s * q, axis=-1)                  # [tile_b, N]
    ss = jnp.sum(s * s, axis=-1)                   # [tile_b, N]
    qq = jnp.sum(q * q, axis=-1)                   # [tile_b, N]

    # cos = dot / max(||s||*||q||, eps)  ==  dot * rsqrt(max(ss*qq, eps^2))
    cos = dot * lax.rsqrt(jnp.maximum(ss * qq, jnp.float32(_EPS * _EPS)))

    # Numerically-stable softmax over N (N is whole inside the block).
    m = jnp.max(cos, axis=-1, keepdims=True)
    e = jnp.exp(cos - m)
    denom = jnp.sum(e, axis=-1, keepdims=True)
    o_ref[...] = (e * pl.reciprocal(denom, approx=True)).astype(o_ref.dtype)


def _pick_tile_b(B, N, D, itemsize, target_bytes=4 * 1024 * 1024):
    """Batch rows per grid step, ~target_bytes per input tile."""
    rows = max(1, target_bytes // max(1, N * D * itemsize))
    if rows >= B:
        return B                       # whole array fits in one block
    tile = (rows // 8) * 8             # (8,128) sublane rule on the [tile_b, N] output block
    if tile == 0:
        # N*D is enormous: keep tiling (don't fall back to an untiled block).
        return 8 if B >= 8 else B
    return tile


def _cosine_distance_3d(support, query, tile_b=None):
    B, N, D = support.shape
    out_dtype = jnp.result_type(support.dtype, query.dtype)

    if tile_b is None:
        tile_b = _pick_tile_b(B, N, D, jnp.dtype(support.dtype).itemsize)
    grid = (pl.cdiv(B, tile_b),)

    in_bytes = (support.size * jnp.dtype(support.dtype).itemsize
                + query.size * jnp.dtype(query.dtype).itemsize)
    cost = pl.CostEstimate(
        flops=8 * B * N * D,                     # 3 fused reductions over D + epilogue
        transcendentals=3 * B * N,               # rsqrt + exp + reciprocal
        bytes_accessed=in_bytes + B * N * jnp.dtype(out_dtype).itemsize,
    )

    return pl.pallas_call(
        _cosine_distance_kernel,
        out_shape=jax.ShapeDtypeStruct((B, N), out_dtype),
        grid_spec=pl.GridSpec(
            grid=grid,
            in_specs=[
                pl.BlockSpec((tile_b, N, D), lambda i: (i, 0, 0)),
                pl.BlockSpec((tile_b, N, D), lambda i: (i, 0, 0)),
            ],
            out_specs=pl.BlockSpec((tile_b, N), lambda i: (i, 0)),
        ),
        compiler_params=pltpu.CompilerParams(
            dimension_semantics=("parallel",),
        ),
        cost_estimate=cost,
    )(support, query)


def cosine_distance(support: jax.Array, query: jax.Array, *, tile_b=None) -> jax.Array:
    """support, query: [B, *, D] -> relation_score: [B, *] (softmax over the last * dim)."""
    assert support.shape == query.shape and support.ndim >= 2
    orig_shape = support.shape
    D = orig_shape[-1]
    N = orig_shape[-2] if support.ndim >= 2 else 1
    lead = orig_shape[:-2]
    Bflat = 1
    for d in lead:
        Bflat *= d
    s3 = support.reshape(Bflat, N, D)
    q3 = query.reshape(Bflat, N, D)
    out = _cosine_distance_3d(s3, q3, tile_b)
    return out.reshape(lead + (N,))


if __name__ == "__main__":
    key = jax.random.PRNGKey(0)
    k1, k2, k3, k4 = jax.random.split(key, 4)

    def ref_fn(s, q):
        dot = jnp.sum(s * q, axis=-1)
        den = jnp.maximum(
            jnp.linalg.norm(s, axis=-1) * jnp.linalg.norm(q, axis=-1), _EPS
        )
        return jax.nn.softmax(dot / den, axis=-1)

    # Small shape implied by the module's forward contract: [B, N, D].
    B, N, D = 2, 8, 32
    support = jax.random.normal(k1, (B, N, D), dtype=jnp.float32)
    query = jax.random.normal(k2, (B, N, D), dtype=jnp.float32)
    out = jax.block_until_ready(cosine_distance(support, query))
    assert out.shape == (B, N)
    assert jnp.allclose(out, ref_fn(support, query), atol=2e-3, rtol=2e-3)

    # Exercise the tiled path: grid > 1 with a partial last block (B % tile_b != 0).
    B2 = 40
    s2 = jax.random.normal(k3, (B2, N, D), dtype=jnp.float32)
    q2 = jax.random.normal(k4, (B2, N, D), dtype=jnp.float32)
    out2 = jax.block_until_ready(cosine_distance(s2, q2, tile_b=16))
    assert out2.shape == (B2, N)
    assert jnp.allclose(out2, ref_fn(s2, q2), atol=2e-3, rtol=2e-3)

    print("KERNEL_OK")
</pallas_src>

<mosaic_0001>
module attributes {stable_mosaic.version = 11 : i64} {
  func.func @_cosine_distance_kernel(%arg0: i32, %arg1: memref<2x8x32xf32, #tpu.memory_space<vmem>>, %arg2: memref<2x8x32xf32, #tpu.memory_space<vmem>>, %arg3: memref<2x8xf32, #tpu.memory_space<vmem>>) attributes {dimension_semantics = [#tpu.dimension_semantics<parallel>], iteration_bounds = array<i64: 1>, scalar_prefetch = 0 : i64, scratch_operands = 0 : i64, tpu.core_type = #tpu.core_type<tc>, window_params = [{transform_indices = @transform_0, window_bounds = array<i64: 2, 8, 32>}, {transform_indices = @transform_1, window_bounds = array<i64: 2, 8, 32>}, {transform_indices = @transform_2, window_bounds = array<i64: 2, 8>}]} {
    %c0 = arith.constant 0 : index
    %c0_0 = arith.constant 0 : index
    %c0_1 = arith.constant 0 : index
    %0 = vector.load %arg1[%c0, %c0_0, %c0_1] : memref<2x8x32xf32, #tpu.memory_space<vmem>>, vector<2x8x32xf32>
    %c0_2 = arith.constant 0 : index
    %c0_3 = arith.constant 0 : index
    %c0_4 = arith.constant 0 : index
    %1 = vector.load %arg2[%c0_2, %c0_3, %c0_4] : memref<2x8x32xf32, #tpu.memory_space<vmem>>, vector<2x8x32xf32>
    %2 = arith.mulf %0, %1 : vector<2x8x32xf32>
    %cst = arith.constant dense<0.000000e+00> : vector<2x8xf32>
    %3 = vector.multi_reduction <add>, %2, %cst [2] : vector<2x8x32xf32> to vector<2x8xf32>
    %4 = arith.mulf %0, %0 : vector<2x8x32xf32>
    %cst_5 = arith.constant dense<0.000000e+00> : vector<2x8xf32>
    %5 = vector.multi_reduction <add>, %4, %cst_5 [2] : vector<2x8x32xf32> to vector<2x8xf32>
    %6 = arith.mulf %1, %1 : vector<2x8x32xf32>
    %cst_6 = arith.constant dense<0.000000e+00> : vector<2x8xf32>
    %7 = vector.multi_reduction <add>, %6, %cst_6 [2] : vector<2x8x32xf32> to vector<2x8xf32>
    %8 = arith.mulf %5, %7 : vector<2x8xf32>
    %cst_7 = arith.constant 1.000000e-16 : f32
    %9 = vector.broadcast %cst_7 : f32 to vector<2x8xf32>
    %10 = arith.maximumf %8, %9 : vector<2x8xf32>
    %11 = math.rsqrt %10 : vector<2x8xf32>
    %12 = arith.mulf %3, %11 : vector<2x8xf32>
    %cst_8 = arith.constant dense<0xFF800000> : vector<2xf32>
    %13 = vector.multi_reduction <maximumf>, %12, %cst_8 [1] : vector<2x8xf32> to vector<2xf32>
    %14 = vector.shape_cast %13 : vector<2xf32> to vector<2x1xf32>
    %15 = vector.broadcast %14 : vector<2x1xf32> to vector<2x8xf32>
    %16 = arith.subf %12, %15 : vector<2x8xf32>
    %17 = math.exp %16 : vector<2x8xf32>
    %cst_9 = arith.constant dense<0.000000e+00> : vector<2xf32>
    %18 = vector.multi_reduction <add>, %17, %cst_9 [1] : vector<2x8xf32> to vector<2xf32>
    %19 = vector.shape_cast %18 : vector<2xf32> to vector<2x1xf32>
    %20 = tpu.reciprocal %19 {approx = true} : vector<2x1xf32> -> vector<2x1xf32>
    %21 = vector.broadcast %20 : vector<2x1xf32> to vector<2x8xf32>
    %22 = arith.mulf %17, %21 : vector<2x8xf32>
    %c0_10 = arith.constant 0 : index
    %c0_11 = arith.constant 0 : index
    %23 = vector.load %arg3[%c0_10, %c0_11] : memref<2x8xf32, #tpu.memory_space<vmem>>, vector<2x8xf32>
    tpu.vector_store %arg3[%c0_10, %c0_11], %22 {strides = array<i32>} : memref<2x8xf32, #tpu.memory_space<vmem>>, vector<2x8xf32>,
    return
  }
  func.func @transform_0(%arg0: i32) -> (i32, i32, i32) {
    %c0_i32 = arith.constant 0 : i32
    %c0_i32_0 = arith.constant 0 : i32
    %c0_i32_1 = arith.constant 0 : i32
    return %arg0, %c0_i32, %c0_i32_0 : i32, i32, i32
  }
  func.func @transform_1(%arg0: i32) -> (i32, i32, i32) {
    %c0_i32 = arith.constant 0 : i32
    %c0_i32_0 = arith.constant 0 : i32
    %c0_i32_1 = arith.constant 0 : i32
    return %arg0, %c0_i32, %c0_i32_0 : i32, i32, i32
  }
  func.func @transform_2(%arg0: i32) -> (i32, i32) {
    %c0_i32 = arith.constant 0 : i32
    %c0_i32_0 = arith.constant 0 : i32
    return %arg0, %c0_i32 : i32, i32
  }
}

</mosaic_0001>

<llo_original>
// kernel: tpu_custom_call.1
$region0: #{tpu_custom_call.1}
  #allocation0 [shape = 'u32[]', space=smem, size = 0x4, offset = 0x4, fixed_abs, tag = 'smem constant byte address 0x4 - core index']
  #allocation1 [shape = 'u32[72,128]{1,0:T(1,128)}', space=vmem, size = 0x9000, scoped, tag = 'internal scratch']
  %s0 = inlined_call_operand.hbm [shape: f32[2,8,32], index: 0, kind: input, shape index: {}]
  %s1 = inlined_call_operand.hbm [shape: f32[2,8,32], index: 1, kind: input, shape index: {}]
  %s2 = inlined_call_operand.hbm [shape: f32[2,8], index: 2, kind: output, shape index: {}]
  %s3 = sld [smem:[#allocation0]]
  $region26: #{tpu_custom_call.1} parent=0
    _
  %s5 = ssub.s32 1, %s3
  %s6 = scalar_select 0, %s5, %s3
  $region1: #{tpu_custom_call.1} parent=0
    #allocation2 [shape = 'u8[8192]{0}', space=vmem, size = 0x2000, scoped, tag = 'input window, operand 0, single buffered']
    #allocation3 [shape = 's32[1]{0}', space=sflag, size = 0x4, scoped, tag = 'scoped memory for tpu_custom_call.1']
    #allocation4 [shape = 's32[1]{0}', space=sflag, size = 0x4, scoped, tag = 'scoped memory for tpu_custom_call.1']
    #allocation5 [shape = 'u8[8192]{0}', space=vmem, size = 0x2000, scoped, tag = 'input window, operand 1, single buffered']
    #allocation6 [shape = 's32[1]{0}', space=sflag, size = 0x4, scoped, tag = 'scoped memory for tpu_custom_call.1']
    #allocation7 [shape = 'u8[1024]{0}', space=vmem, size = 0x400, scoped, tag = 'output window, operand 0, single buffered']
    %7 = vsyncpa [#allocation3], 0
    %8 = vsyncpa [#allocation6], 0
    %9 = vsyncpa [#allocation4], 0
    // Predicated region
    $region2: #{tpu_custom_call.1} parent=1 // pred_check
      _
    $region3: #{tpu_custom_call.1} parent=1 // pred_check_branch
      %11 = sbr.rel (0) target = $region5
    $region4: #{tpu_custom_call.1} parent=1 // pred_region
      %13 = vsyncadd [#allocation3], 0
      %s14 = sshll.u32 %s0, 4
      %s15 = int_to_ptr.hbm [resolvable:$true] %s14
      %s16 = sshll.u32 [#allocation2], 4
      %s17 = int_to_ptr.vmem [resolvable:$true] %s16
      %22 = dma.hbm_to_vmem [thread:$0]  %s15, 256, %s17, [#allocation3], 128, 128, 8
    $region5: #{tpu_custom_call.1} parent=1 // pred_fallthru
      _
    // Predicated region
    $region6: #{tpu_custom_call.1} parent=1 // pred_check
      _
    $region7: #{tpu_custom_call.1} parent=1 // pred_check_branch
      %24 = sbr.rel (0) target = $region9
    $region8: #{tpu_custom_call.1} parent=1 // pred_region
      %26 = vsyncadd [#allocation6], 0
      %s27 = sshll.u32 %s1, 4
      %s28 = int_to_ptr.hbm [resolvable:$true] %s27
      %s29 = sshll.u32 [#allocation5], 4
      %s30 = int_to_ptr.vmem [resolvable:$true] %s29
      %35 = dma.hbm_to_vmem [thread:$0]  %s28, 256, %s30, [#allocation6], 128, 128, 8
    $region9: #{tpu_custom_call.1} parent=1 // pred_fallthru
      _
    // Predicated region
    $region10: #{tpu_custom_call.1} parent=1 // pred_check
      _
    $region11: #{tpu_custom_call.1} parent=1 // pred_check_branch
      %37 = sbr.rel (0) target = $region13
    $region12: #{tpu_custom_call.1} parent=1 // pred_region
      %39 = dma.done [#allocation3], 256
    $region13: #{tpu_custom_call.1} parent=1 // pred_fallthru
      _
    // Predicated region
    $region14: #{tpu_custom_call.1} parent=1 // pred_check
      _
    $region15: #{tpu_custom_call.1} parent=1 // pred_check_branch
      %41 = sbr.rel (0) target = $region17
    $region16: #{tpu_custom_call.1} parent=1 // pred_region
      %43 = dma.done [#allocation6], 256
    $region17: #{tpu_custom_call.1} parent=1 // pred_fallthru
      _
    %v44 = vld [vmem:[#allocation2] sm:$0xff]
    %v45 = vld [vmem:[#allocation2 + $0x8] sm:$0xff]
    %v46 = vld [vmem:[#allocation5] sm:$0xff]
    %v47 = vld [vmem:[#allocation5 + $0x8] sm:$0xff]
    %v48 = vmul.f32 %v44, %v46
    %v49 = vmul.f32 %v45, %v47
    %vm50 = vcmask 261120
    %v51 = vsel %vm50, %v48, 0.0
    %52 = vadd.xlane.f32.xlu0 %v51
    %v53 = vpop.xlane.xlu0 %52
    %v54 = vsel %vm50, %v49, 0.0
    %55 = vadd.xlane.f32.xlu0 %v54
    %v56 = vpop.xlane.xlu0 %55
    %v57 = vmul.f32 %v44, %v44
    %v58 = vmul.f32 %v45, %v45
    %v59 = vsel %vm50, %v57, 0.0
    %60 = vadd.xlane.f32.xlu0 %v59
    %v61 = vpop.xlane.xlu0 %60
    %v62 = vsel %vm50, %v58, 0.0
    %63 = vadd.xlane.f32.xlu0 %v62
    %v64 = vpop.xlane.xlu0 %63
    %v65 = vmul.f32 %v46, %v46
    %v66 = vmul.f32 %v47, %v47
    %v67 = vsel %vm50, %v65, 0.0
    %68 = vadd.xlane.f32.xlu0 %v67
    %v69 = vpop.xlane.xlu0 %68
    %v70 = vsel %vm50, %v66, 0.0
    %71 = vadd.xlane.f32.xlu0 %v70
    %v72 = vpop.xlane.xlu0 %71
    %v73 = vmul.f32 %v61, %v69
    %v74 = vmul.f32 %v64, %v72
    %v75 = vmax.f32 %v73, 1e-16
    %v76 = vmax.f32 %v74, 1e-16
    %v77 = vrsqrt.pop %v75
    %v78 = vmul.f32 %v77, %v75
    %v79 = vmul.f32 %v78, %v77
    %v80 = vmul.f32 0.5, %v79
    %v81 = vsub.f32 1.5, %v80
    %v82 = vmul.f32 %v77, %v81
    %vm83 = vweird.f32 %v75
    %vm84 = vweird.f32 %v77
    %vm85 = vmor %vm83, %vm84
    %v86 = vsel %vm85, %v77, %v82
    %v87 = vrsqrt.pop %v76
    %v88 = vmul.f32 %v87, %v76
    %v89 = vmul.f32 %v88, %v87
    %v90 = vmul.f32 0.5, %v89
    %v91 = vsub.f32 1.5, %v90
    %v92 = vmul.f32 %v87, %v91
    %vm93 = vweird.f32 %v76
    %vm94 = vweird.f32 %v87
    %vm95 = vmor %vm93, %vm94
    %v96 = vsel %vm95, %v87, %v92
    %v97 = vmul.f32 %v53, %v86
    %v98 = vmul.f32 %v56, %v96
    %v101 = vlaneseq
    %v102 = vand.u32 %v101, 127
    %v103 = vperm.slane %v97, %v102
    %v104 = vperm.slane %v98, %v102
    %vm105 = vcmask 1041409
    %v106 = vsel %vm105, %v104, %v103
    %vm108 = vcmask 58368
    %v109 = vsel %vm108, %v106, -inf
    %110 = vmax.xlane.f32.xlu0 %v109
    %v111 = vpop.xlane.xlu0 %110
    %v113 = vperm.slane %v111, 0
    %v114 = vperm.slane %v111, 1
    %v117 = vsub.f32 %v97, %v113
    %v118 = vsub.f32 %v98, %v114
    %v119 = vmul.f32 %v117, 1.442695
    %v120 = vpow.pop %v119
    %v121 = vmul.f32 %v118, 1.442695
    %v122 = vpow.pop %v121
    %125 = vset.pattern.permute.xlu0 0
    %126 = vperm.xlu0 %125, %v120
    %v127 = vpop.permute.xlu0 %126
    %128 = vset.pattern.permute.xlu0 0
    %129 = vperm.xlu0 %128, %v122
    %v130 = vpop.permute.xlu0 %129
    %v131 = vperm.slane %v127, %v102
    %v132 = vperm.slane %v130, %v102
    %v133 = vsel %vm105, %v132, %v131
    %v135 = vsel %vm108, %v133, 0.0
    %136 = vadd.xlane.f32.xlu0 %v135
    %v137 = vpop.xlane.xlu0 %136
    %v138 = vrcp.pop %v137
    %v140 = vperm.slane %v138, 0
    %v141 = vperm.slane %v138, 1
    %v144 = vmul.f32 %v120, %v140
    %v145 = vmul.f32 %v122, %v141
    %148 = vset.pattern.permute.xlu0 0
    %149 = vperm.xlu0 %148, %v144
    %v150 = vpop.permute.xlu0 %149
    %151 = vset.pattern.permute.xlu0 0
    %152 = vperm.xlu0 %151, %v145
    %v153 = vpop.permute.xlu0 %152
    %v154 = vperm.slane %v150, %v102
    %v155 = vperm.slane %v153, %v102
    %v156 = vsel %vm105, %v155, %v154
    %158 = vst.msk [vmem:[#allocation7] sm:$0x3] %vm108, %v156
    // Predicated region
    $region18: #{tpu_custom_call.1} parent=1 // pred_check
      _
    $region19: #{tpu_custom_call.1} parent=1 // pred_check_branch
      %160 = sbr.rel (0) target = $region21
    $region20: #{tpu_custom_call.1} parent=1 // pred_region
      %162 = vsyncadd [#allocation4], 0
      %s164 = sshll.u32 [#allocation7], 4
      %s165 = int_to_ptr.vmem [resolvable:$true] %s164
      %s166 = sshll.u32 %s2, 4
      %s167 = int_to_ptr.hbm [resolvable:$true] %s166
      %169 = dma.vmem_to_hbm [thread:$0]  %s165, 32, %s167, [#allocation4]
    $region21: #{tpu_custom_call.1} parent=1 // pred_fallthru
      _
    // Predicated region
    $region22: #{tpu_custom_call.1} parent=1 // pred_check
      _
    $region23: #{tpu_custom_call.1} parent=1 // pred_check_branch
      %171 = sbr.rel (0) target = $region25
    $region24: #{tpu_custom_call.1} parent=1 // pred_region
      %173 = dma.done [#allocation4], 32
    $region25: #{tpu_custom_call.1} parent=1 // pred_fallthru
      _
    %174 = vsyncpa [#allocation3], 1
    %175 = vsyncpa [#allocation6], 1
    %176 = vsyncpa [#allocation4], 1

</llo_original>
